<compile_context>
chip_gen: v7x
topology: tpu7x:2x2x1
jax: 0.10.0
libtpu: 0.0.40
codegen_flags: <defaults>
</compile_context>

<pallas_src>
import functools

import jax
import jax.numpy as jnp
from jax.experimental import pallas as pl
from jax.experimental.pallas import tpu as pltpu


# --------------------------------------------------------------------------------------
# Kernels
# --------------------------------------------------------------------------------------
def linear_kernel(x_ref, w_ref, b_ref, out_ref, *, compute_dtype):
    # x: (TR, Dp) f32 (cast fused here), w: (Dp, Dp) compute_dtype (already transposed),
    # b: (1, Dp) f32.  out = x @ w + b  in out_ref.dtype.
    x = x_ref[...].astype(compute_dtype)
    acc = jnp.dot(x, w_ref[...], preferred_element_type=jnp.float32)
    out_ref[...] = (acc + b_ref[...]).astype(out_ref.dtype)


def pairwise_sigmoid_kernel(c1_ref, c2_ref, out_ref, *, approx):
    # c1: (TM, Dp), c2: (TN, Dp) -> sigmoid(c1 @ c2.T) tile (TM, TN).
    # Contracting dims (1, 1): no in-kernel transpose of c2.
    scores = jax.lax.dot_general(
        c1_ref[...],
        c2_ref[...],
        dimension_numbers=(((1,), (1,)), ((), ())),
        preferred_element_type=jnp.float32,
    )
    if approx:
        # exp + approx recip both ride the EUP slot (free under DMA/MXU).
        probs = pl.reciprocal(1.0 + jnp.exp(-scores), approx=True)
    else:
        probs = jax.nn.sigmoid(scores)
    out_ref[...] = probs.astype(out_ref.dtype)


# --------------------------------------------------------------------------------------
# Helpers
# --------------------------------------------------------------------------------------
def _round_up(x, m):
    return ((x + m - 1) // m) * m


def _pad2d(a, rows, cols):
    pr, pc = rows - a.shape[0], cols - a.shape[1]
    if pr == 0 and pc == 0:
        return a
    return jnp.pad(a, ((0, pr), (0, pc)))


def _pick_tile_multiple(total_tiles, max_tiles):
    """Largest k <= max_tiles that divides total_tiles (k >= 1)."""
    k = max(1, min(total_tiles, max_tiles))
    while total_tiles % k:
        k -= 1
    return k


def _vmem_limit(per_buffer_bytes):
    """Double-buffered working set + headroom; floor at the 32 MiB scoped default,
    cap below v7x's 64 MiB physical VMEM."""
    need = 2 * per_buffer_bytes + (4 << 20)
    return int(min(48 << 20, max(32 << 20, need)))


# --------------------------------------------------------------------------------------
# Wrappers
# --------------------------------------------------------------------------------------
def _linear(x_pad, w_t, b, tile_rows, compute_dtype):
    """x_pad: (Np, Dp) f32, w_t: (Dp, Dp) compute_dtype, b: (1, Dp) f32
    -> (Np, Dp) compute_dtype."""
    n, d = x_pad.shape
    cd_size = jnp.dtype(compute_dtype).itemsize
    cost = pl.CostEstimate(
        flops=2 * n * d * d,
        transcendentals=0,
        bytes_accessed=n * d * 4 + d * d * cd_size + d * 4 + n * d * cd_size,
    )
    vmem = _vmem_limit(tile_rows * d * 4 + tile_rows * d * cd_size + d * d * cd_size + d * 4)
    kernel = functools.partial(linear_kernel, compute_dtype=compute_dtype)
    return pl.pallas_call(
        kernel,
        grid=(n // tile_rows,),
        in_specs=[
            pl.BlockSpec((tile_rows, d), lambda i: (i, 0)),   # x row tile (f32, cast in-kernel)
            # Constant index_map -> fetched once, VMEM-resident across the grid.
            # TODO(synk): for D >~ 2-3K on v7x, add pipeline_mode=pl.Buffered(1) here and
            # a K-tiled accumulator path.
            pl.BlockSpec((d, d), lambda i: (0, 0)),           # weight (transposed)
            pl.BlockSpec((1, d), lambda i: (0, 0)),           # bias
        ],
        out_specs=pl.BlockSpec((tile_rows, d), lambda i: (i, 0)),
        out_shape=jax.ShapeDtypeStruct((n, d), compute_dtype),
        compiler_params=pltpu.CompilerParams(
            dimension_semantics=("parallel",), vmem_limit_bytes=vmem),
        cost_estimate=cost,
    )(x_pad, w_t, b)


def _pairwise_sigmoid(c1, c2, tile_m, tile_n, out_dtype, approx):
    """c1: (N1p, Dp), c2: (N2p, Dp) -> sigmoid(c1 @ c2.T) as (N1p, N2p) out_dtype."""
    n1p, dp = c1.shape
    n2p = c2.shape[0]
    gm, gn = n1p // tile_m, n2p // tile_n

    # Choose grid order so the cheaper-to-re-read operand is the streamed (inner) one.
    # Default (i outer, j inner): c2 re-read gm times; swapped: c1 re-read gn times.
    swap = (n2p * gm) > (n1p * gn)
    if swap:
        grid = (gn, gm)
        c1_spec = pl.BlockSpec((tile_m, dp), lambda j, i: (i, 0))
        c2_spec = pl.BlockSpec((tile_n, dp), lambda j, i: (j, 0))
        out_spec = pl.BlockSpec((tile_m, tile_n), lambda j, i: (i, j))
    else:
        grid = (gm, gn)
        c1_spec = pl.BlockSpec((tile_m, dp), lambda i, j: (i, 0))
        c2_spec = pl.BlockSpec((tile_n, dp), lambda i, j: (j, 0))
        out_spec = pl.BlockSpec((tile_m, tile_n), lambda i, j: (i, j))

    out_size = jnp.dtype(out_dtype).itemsize
    cd_size = c1.dtype.itemsize
    cost = pl.CostEstimate(
        flops=2 * n1p * n2p * dp,
        transcendentals=n1p * n2p,
        bytes_accessed=(n1p * dp + n2p * dp) * cd_size + n1p * n2p * out_size,
    )
    vmem = _vmem_limit(
        tile_m * dp * cd_size + tile_n * dp * cd_size + tile_m * tile_n * out_size)
    kernel = functools.partial(pairwise_sigmoid_kernel, approx=approx)
    return pl.pallas_call(
        kernel,
        grid=grid,
        in_specs=[c1_spec, c2_spec],
        out_specs=out_spec,
        out_shape=jax.ShapeDtypeStruct((n1p, n2p), out_dtype),
        compiler_params=pltpu.CompilerParams(
            dimension_semantics=("parallel", "parallel"), vmem_limit_bytes=vmem),
        cost_estimate=cost,
    )(c1, c2)


def edge_predictor(x1, x2, w1, b1, w2, b2, *, tile_m=1024, tile_n=1024,
                   linear_rows=4096, compute_dtype=jnp.bfloat16, out_dtype=None):
    """EdgePredictor forward.

    x1: [N1, D], x2: [N2, D]
    w1, w2: PyTorch-layout Linear weights [D_out, D_in];  b1, b2: biases [D].
    Returns sigmoid((x1 @ w1.T + b1) @ (x2 @ w2.T + b2).T) as [N1, N2].
    out_dtype defaults to compute_dtype (bf16 fast path); pass jnp.float32 for exact
    dtype parity with the PyTorch module.
    """
    n1, d = x1.shape
    n2 = x2.shape[0]
    cd = compute_dtype
    od = cd if out_dtype is None else out_dtype
    approx = jnp.dtype(cd) != jnp.dtype(jnp.float32)

    dp = _round_up(d, 128)                        # lane-dense feature dim
    tm = min(tile_m, _round_up(n1, 8))            # sublane-aligned adjacency row tile
    tn = min(tile_n, _round_up(n2, 128))          # lane-dense adjacency column tile
    n1p = _round_up(n1, tm)
    n2p = _round_up(n2, tn)

    # Linear row tiles: as large as allowed while dividing the padded row counts
    # (decoupled from tm/tn except for divisibility).
    tr1 = tm * _pick_tile_multiple(n1p // tm, max(1, linear_rows // tm))
    tr2 = tn * _pick_tile_multiple(n2p // tn, max(1, linear_rows // tn))

    # Padding only; the f32 -> compute_dtype cast of x is fused into linear_kernel.
    x1p = _pad2d(x1, n1p, dp).astype(jnp.float32)
    x2p = _pad2d(x2, n2p, dp).astype(jnp.float32)
    w1tp = _pad2d(w1.T, dp, dp).astype(cd)        # pre-transposed: kernel does x @ w_t
    w2tp = _pad2d(w2.T, dp, dp).astype(cd)
    b1p = _pad2d(b1.reshape(1, -1), 1, dp).astype(jnp.float32)
    b2p = _pad2d(b2.reshape(1, -1), 1, dp).astype(jnp.float32)

    c1 = _linear(x1p, w1tp, b1p, tr1, cd)         # each Linear computed exactly once
    c2 = _linear(x2p, w2tp, b2p, tr2, cd)
    out = _pairwise_sigmoid(c1, c2, tm, tn, od, approx)
    return out[:n1, :n2]


# --------------------------------------------------------------------------------------
# Reference + test
# --------------------------------------------------------------------------------------
def edge_predictor_ref(x1, x2, w1, b1, w2, b2):
    c1 = x1 @ w1.T + b1
    c2 = x2 @ w2.T + b2
    return jax.nn.sigmoid(c1 @ c2.T)


def _make_inputs(key, n1, n2, d):
    k_x1, k_x2, k_w1, k_b1, k_w2, k_b2 = jax.random.split(key, 6)
    bound = 1.0 / (d ** 0.5)
    x1 = jax.random.normal(k_x1, (n1, d), dtype=jnp.float32)
    x2 = jax.random.normal(k_x2, (n2, d), dtype=jnp.float32)
    # reset_parameters(): weights ~ N(0, 0.05); biases keep default nn.Linear init.
    w1 = 0.05 * jax.random.normal(k_w1, (d, d), dtype=jnp.float32)
    w2 = 0.05 * jax.random.normal(k_w2, (d, d), dtype=jnp.float32)
    b1 = jax.random.uniform(k_b1, (d,), dtype=jnp.float32, minval=-bound, maxval=bound)
    b2 = jax.random.uniform(k_b2, (d,), dtype=jnp.float32, minval=-bound, maxval=bound)
    return x1, x2, w1, b1, w2, b2


if __name__ == "__main__":
    fwd_fast = jax.jit(functools.partial(edge_predictor, compute_dtype=jnp.bfloat16))
    fwd_f32 = jax.jit(functools.partial(edge_predictor, compute_dtype=jnp.float32,
                                        out_dtype=jnp.float32))

    # --- Case 1: original tiny / unaligned shapes (nembed=32, N1=8, N2=16) -------------
    args = _make_inputs(jax.random.PRNGKey(0), n1=8, n2=16, d=32)
    ref = edge_predictor_ref(*args)

    out_f32 = jax.block_until_ready(fwd_f32(*args))
    assert out_f32.shape == (8, 16) and out_f32.dtype == jnp.float32
    assert jnp.allclose(out_f32, ref, atol=1e-4, rtol=1e-4), "f32 path mismatch (case 1)"

    out_fast = jax.block_until_ready(fwd_fast(*args))
    assert out_fast.shape == (8, 16)
    assert jnp.allclose(out_fast.astype(jnp.float32), ref, atol=2e-2, rtol=2e-2), \
        "bf16 path mismatch (case 1)"

    # --- Case 2: aligned, multi-tile shapes to exercise the pipelined grids ------------
    args2 = _make_inputs(jax.random.PRNGKey(1), n1=512, n2=1024, d=128)
    ref2 = edge_predictor_ref(*args2)

    out2_f32 = jax.block_until_ready(fwd_f32(*args2))
    assert out2_f32.shape == (512, 1024)
    assert jnp.allclose(out2_f32, ref2, atol=1e-4, rtol=1e-4), "f32 path mismatch (case 2)"

    out2_fast = jax.block_until_ready(fwd_fast(*args2))
    assert out2_fast.shape == (512, 1024)
    assert jnp.allclose(out2_fast.astype(jnp.float32), ref2, atol=5e-2, rtol=5e-2), \
        "bf16 path mismatch (case 2)"

    print("KERNEL_OK")
</pallas_src>

<mosaic_0001>
module attributes {stable_mosaic.version = 11 : i64} {
  func.func @linear_kernel(%arg0: i32, %arg1: memref<8x128xf32, #tpu.memory_space<vmem>>, %arg2: memref<128x128xf32, #tpu.memory_space<vmem>>, %arg3: memref<1x128xf32, #tpu.memory_space<vmem>>, %arg4: memref<8x128xf32, #tpu.memory_space<vmem>>) attributes {dimension_semantics = [#tpu.dimension_semantics<parallel>], iteration_bounds = array<i64: 1>, scalar_prefetch = 0 : i64, scratch_operands = 0 : i64, tpu.core_type = #tpu.core_type<tc>, window_params = [{transform_indices = @transform_0, window_bounds = array<i64: 8, 128>}, {pipeline_mode = #tpu.pipeline_mode<synchronous>, transform_indices = @transform_1, window_bounds = array<i64: 128, 128>}, {pipeline_mode = #tpu.pipeline_mode<synchronous>, transform_indices = @transform_2, window_bounds = array<i64: 1, 128>}, {transform_indices = @transform_3, window_bounds = array<i64: 8, 128>}]} {
    %c0 = arith.constant 0 : index
    %c0_0 = arith.constant 0 : index
    %0 = vector.load %arg1[%c0, %c0_0] : memref<8x128xf32, #tpu.memory_space<vmem>>, vector<8x128xf32>
    %c0_1 = arith.constant 0 : index
    %c0_2 = arith.constant 0 : index
    %1 = vector.load %arg2[%c0_1, %c0_2] : memref<128x128xf32, #tpu.memory_space<vmem>>, vector<128x128xf32>
    %cst = arith.constant dense<0.000000e+00> : vector<8x128xf32>
    %2 = tpu.matmul %0, %1, %cst {dimension_numbers = #tpu.dot_dimension_numbers<[1], [0], [0], [1], [0, 0, 1, 1], [], []>} : vector<8x128xf32>, vector<128x128xf32>, vector<8x128xf32> -> vector<8x128xf32>
    %c0_3 = arith.constant 0 : index
    %c0_4 = arith.constant 0 : index
    %3 = vector.load %arg3[%c0_3, %c0_4] : memref<1x128xf32, #tpu.memory_space<vmem>>, vector<1x128xf32>
    %4 = vector.broadcast %3 : vector<1x128xf32> to vector<8x128xf32>
    %5 = arith.addf %2, %4 : vector<8x128xf32>
    %c0_5 = arith.constant 0 : index
    %c0_6 = arith.constant 0 : index
    %6 = vector.load %arg4[%c0_5, %c0_6] : memref<8x128xf32, #tpu.memory_space<vmem>>, vector<8x128xf32>
    tpu.vector_store %arg4[%c0_5, %c0_6], %5 {strides = array<i32>} : memref<8x128xf32, #tpu.memory_space<vmem>>, vector<8x128xf32>,
    return
  }
  func.func @transform_0(%arg0: i32) -> (i32, i32) {
    %c0_i32 = arith.constant 0 : i32
    %c0_i32_0 = arith.constant 0 : i32
    return %arg0, %c0_i32 : i32, i32
  }
  func.func @transform_1(%arg0: i32) -> (i32, i32) {
    %c0_i32 = arith.constant 0 : i32
    %c0_i32_0 = arith.constant 0 : i32
    %c0_i32_1 = arith.constant 0 : i32
    return %c0_i32, %c0_i32_0 : i32, i32
  }
  func.func @transform_2(%arg0: i32) -> (i32, i32) {
    %c0_i32 = arith.constant 0 : i32
    %c0_i32_0 = arith.constant 0 : i32
    %c0_i32_1 = arith.constant 0 : i32
    return %c0_i32, %c0_i32_0 : i32, i32
  }
  func.func @transform_3(%arg0: i32) -> (i32, i32) {
    %c0_i32 = arith.constant 0 : i32
    %c0_i32_0 = arith.constant 0 : i32
    return %arg0, %c0_i32 : i32, i32
  }
}

module attributes {stable_mosaic.version = 11 : i64} {
  func.func @linear_kernel(%arg0: i32, %arg1: memref<128x128xf32, #tpu.memory_space<vmem>>, %arg2: memref<128x128xf32, #tpu.memory_space<vmem>>, %arg3: memref<1x128xf32, #tpu.memory_space<vmem>>, %arg4: memref<128x128xf32, #tpu.memory_space<vmem>>) attributes {dimension_semantics = [#tpu.dimension_semantics<parallel>], iteration_bounds = array<i64: 1>, scalar_prefetch = 0 : i64, scratch_operands = 0 : i64, tpu.core_type = #tpu.core_type<tc>, window_params = [{transform_indices = @transform_0, window_bounds = array<i64: 128, 128>}, {pipeline_mode = #tpu.pipeline_mode<synchronous>, transform_indices = @transform_1, window_bounds = array<i64: 128, 128>}, {pipeline_mode = #tpu.pipeline_mode<synchronous>, transform_indices = @transform_2, window_bounds = array<i64: 1, 128>}, {transform_indices = @transform_3, window_bounds = array<i64: 128, 128>}]} {
    %c0 = arith.constant 0 : index
    %c0_0 = arith.constant 0 : index
    %0 = vector.load %arg1[%c0, %c0_0] : memref<128x128xf32, #tpu.memory_space<vmem>>, vector<128x128xf32>
    %c0_1 = arith.constant 0 : index
    %c0_2 = arith.constant 0 : index
    %1 = vector.load %arg2[%c0_1, %c0_2] : memref<128x128xf32, #tpu.memory_space<vmem>>, vector<128x128xf32>
    %cst = arith.constant dense<0.000000e+00> : vector<128x128xf32>
    %2 = tpu.matmul %0, %1, %cst {dimension_numbers = #tpu.dot_dimension_numbers<[1], [0], [0], [1], [0, 0, 1, 1], [], []>} : vector<128x128xf32>, vector<128x128xf32>, vector<128x128xf32> -> vector<128x128xf32>
    %c0_3 = arith.constant 0 : index
    %c0_4 = arith.constant 0 : index
    %3 = vector.load %arg3[%c0_3, %c0_4] : memref<1x128xf32, #tpu.memory_space<vmem>>, vector<1x128xf32>
    %4 = vector.broadcast %3 : vector<1x128xf32> to vector<128x128xf32>
    %5 = arith.addf %2, %4 : vector<128x128xf32>
    %c0_5 = arith.constant 0 : index
    %c0_6 = arith.constant 0 : index
    %6 = vector.load %arg4[%c0_5, %c0_6] : memref<128x128xf32, #tpu.memory_space<vmem>>, vector<128x128xf32>
    tpu.vector_store %arg4[%c0_5, %c0_6], %5 {strides = array<i32>} : memref<128x128xf32, #tpu.memory_space<vmem>>, vector<128x128xf32>,
    return
  }
  func.func @transform_0(%arg0: i32) -> (i32, i32) {
    %c0_i32 = arith.constant 0 : i32
    %c0_i32_0 = arith.constant 0 : i32
    return %arg0, %c0_i32 : i32, i32
  }
  func.func @transform_1(%arg0: i32) -> (i32, i32) {
    %c0_i32 = arith.constant 0 : i32
    %c0_i32_0 = arith.constant 0 : i32
    %c0_i32_1 = arith.constant 0 : i32
    return %c0_i32, %c0_i32_0 : i32, i32
  }
  func.func @transform_2(%arg0: i32) -> (i32, i32) {
    %c0_i32 = arith.constant 0 : i32
    %c0_i32_0 = arith.constant 0 : i32
    %c0_i32_1 = arith.constant 0 : i32
    return %c0_i32, %c0_i32_0 : i32, i32
  }
  func.func @transform_3(%arg0: i32) -> (i32, i32) {
    %c0_i32 = arith.constant 0 : i32
    %c0_i32_0 = arith.constant 0 : i32
    return %arg0, %c0_i32 : i32, i32
  }
}

module attributes {stable_mosaic.version = 11 : i64} {
  func.func @pairwise_sigmoid_kernel(%arg0: i32, %arg1: i32, %arg2: memref<8x128xf32, #tpu.memory_space<vmem>>, %arg3: memref<128x128xf32, #tpu.memory_space<vmem>>, %arg4: memref<8x128xf32, #tpu.memory_space<vmem>>) attributes {dimension_semantics = [#tpu.dimension_semantics<parallel>, #tpu.dimension_semantics<parallel>], iteration_bounds = array<i64: 1, 1>, scalar_prefetch = 0 : i64, scratch_operands = 0 : i64, tpu.core_type = #tpu.core_type<tc>, window_params = [{transform_indices = @transform_0, window_bounds = array<i64: 8, 128>}, {transform_indices = @transform_1, window_bounds = array<i64: 128, 128>}, {transform_indices = @transform_2, window_bounds = array<i64: 8, 128>}]} {
    %c0 = arith.constant 0 : index
    %c0_0 = arith.constant 0 : index
    %0 = vector.load %arg2[%c0, %c0_0] : memref<8x128xf32, #tpu.memory_space<vmem>>, vector<8x128xf32>
    %c0_1 = arith.constant 0 : index
    %c0_2 = arith.constant 0 : index
    %1 = vector.load %arg3[%c0_1, %c0_2] : memref<128x128xf32, #tpu.memory_space<vmem>>, vector<128x128xf32>
    %cst = arith.constant dense<0.000000e+00> : vector<8x128xf32>
    %2 = tpu.matmul %0, %1, %cst {dimension_numbers = #tpu.dot_dimension_numbers<[1], [1], [0], [0], [0, 0, 1, 0], [], []>} : vector<8x128xf32>, vector<128x128xf32>, vector<8x128xf32> -> vector<8x128xf32>
    %3 = arith.negf %2 : vector<8x128xf32>
    %4 = math.exp %3 : vector<8x128xf32>
    %cst_3 = arith.constant 1.000000e+00 : f32
    %5 = vector.broadcast %cst_3 : f32 to vector<8x128xf32>
    %6 = arith.addf %5, %4 : vector<8x128xf32>
    %7 = arith.divf %5, %6 : vector<8x128xf32>
    %c0_4 = arith.constant 0 : index
    %c0_5 = arith.constant 0 : index
    %8 = vector.load %arg4[%c0_4, %c0_5] : memref<8x128xf32, #tpu.memory_space<vmem>>, vector<8x128xf32>
    tpu.vector_store %arg4[%c0_4, %c0_5], %7 {strides = array<i32>} : memref<8x128xf32, #tpu.memory_space<vmem>>, vector<8x128xf32>,
    return
  }
  func.func @transform_0(%arg0: i32, %arg1: i32) -> (i32, i32) {
    %c0_i32 = arith.constant 0 : i32
    %c0_i32_0 = arith.constant 0 : i32
    return %arg1, %c0_i32 : i32, i32
  }
  func.func @transform_1(%arg0: i32, %arg1: i32) -> (i32, i32) {
    %c0_i32 = arith.constant 0 : i32
    %c0_i32_0 = arith.constant 0 : i32
    return %arg0, %c0_i32 : i32, i32
  }
  func.func @transform_2(%arg0: i32, %arg1: i32) -> (i32, i32) {
    %c0_i32 = arith.constant 0 : i32
    return %arg1, %arg0 : i32, i32
  }
}

</mosaic_0001>

<llo_original>
// kernel: edge_predictor.4
$region0: #{edge_predictor.4}
  #allocation0 [shape = 'u32[]', space=smem, size = 0x4, offset = 0x4, fixed_abs, tag = 'smem constant byte address 0x4 - core index']
  #allocation1 [shape = 'u32[144,128]{1,0:T(1,128)}', space=vmem, size = 0x12000, scoped, tag = 'internal scratch']
  %s0 = inlined_call_operand.vmem [shape: f32[128,128], index: 0, kind: input, shape index: {}]
  %s1 = inlined_call_operand.vmem [shape: f32[128,128], index: 1, kind: input, shape index: {}]
  %s2 = inlined_call_operand.vmem [shape: f32[1,128], index: 2, kind: input, shape index: {}]
  %s3 = inlined_call_operand.vmem [shape: f32[128,128], index: 3, kind: output, shape index: {}]
  %s4 = sld [smem:[#allocation0]]
  $region22: #{edge_predictor.4} parent=0
    _
  %s6 = ssub.s32 1, %s4
  %s7 = scalar_select 0, %s6, %s4
  // Predicated region
  $region2: #{edge_predictor.4} parent=0 // pred_check
    _
  $region3: #{edge_predictor.4} parent=0 // pred_check_branch
    %9 = sbr.rel (0) target = $region5
  $region4: #{edge_predictor.4} parent=0 // pred_region
    _
  $region5: #{edge_predictor.4} parent=0 // pred_fallthru
    _
  // Predicated region
  $region6: #{edge_predictor.4} parent=0 // pred_check
    _
  $region7: #{edge_predictor.4} parent=0 // pred_check_branch
    %11 = sbr.rel (0) target = $region9
  $region8: #{edge_predictor.4} parent=0 // pred_region
    _
  $region9: #{edge_predictor.4} parent=0 // pred_fallthru
    _
  // Predicated region
  $region10: #{edge_predictor.4} parent=0 // pred_check
    _
  $region11: #{edge_predictor.4} parent=0 // pred_check_branch
    %13 = sbr.rel (0) target = $region13
  $region12: #{edge_predictor.4} parent=0 // pred_region
    _
  $region13: #{edge_predictor.4} parent=0 // pred_fallthru
    _
  %v14 = vld [vmem:[%s0] sm:$0xff]
  %v15 = vld [vmem:[%s0 + $0x8] sm:$0xff]
  %v16 = vld [vmem:[%s0 + $0x10] sm:$0xff]
  %v17 = vld [vmem:[%s0 + $0x18] sm:$0xff]
  %v18 = vld [vmem:[%s0 + $0x20] sm:$0xff]
  %v19 = vld [vmem:[%s0 + $0x28] sm:$0xff]
  %v20 = vld [vmem:[%s0 + $0x30] sm:$0xff]
  %v21 = vld [vmem:[%s0 + $0x38] sm:$0xff]
  %v22 = vld [vmem:[%s0 + $0x40] sm:$0xff]
  %v23 = vld [vmem:[%s0 + $0x48] sm:$0xff]
  %v24 = vld [vmem:[%s0 + $0x50] sm:$0xff]
  %v25 = vld [vmem:[%s0 + $0x58] sm:$0xff]
  %v26 = vld [vmem:[%s0 + $0x60] sm:$0xff]
  %v27 = vld [vmem:[%s0 + $0x68] sm:$0xff]
  %v28 = vld [vmem:[%s0 + $0x70] sm:$0xff]
  %v29 = vld [vmem:[%s0 + $0x78] sm:$0xff]
  %v30 = vld [vmem:[%s1] sm:$0xff]
  %v31 = vld [vmem:[%s1 + $0x8] sm:$0xff]
  %v32 = vld [vmem:[%s1 + $0x10] sm:$0xff]
  %v33 = vld [vmem:[%s1 + $0x18] sm:$0xff]
  %v34 = vld [vmem:[%s1 + $0x20] sm:$0xff]
  %v35 = vld [vmem:[%s1 + $0x28] sm:$0xff]
  %v36 = vld [vmem:[%s1 + $0x30] sm:$0xff]
  %v37 = vld [vmem:[%s1 + $0x38] sm:$0xff]
  %v38 = vld [vmem:[%s1 + $0x40] sm:$0xff]
  %v39 = vld [vmem:[%s1 + $0x48] sm:$0xff]
  %v40 = vld [vmem:[%s1 + $0x50] sm:$0xff]
  %v41 = vld [vmem:[%s1 + $0x58] sm:$0xff]
  %v42 = vld [vmem:[%s1 + $0x60] sm:$0xff]
  %v43 = vld [vmem:[%s1 + $0x68] sm:$0xff]
  %v44 = vld [vmem:[%s1 + $0x70] sm:$0xff]
  %v45 = vld [vmem:[%s1 + $0x78] sm:$0xff]
  %v46 = vld [vmem:[%s2] sm:$0x1]
  %v48 = vlaneseq
  %v49 = vshrl.u32 %v48, 7
  %v50 = vsub.s32 0, %v49
  %v51 = vrot.slane %v46, %v50
  %53 = vmatprep.subr.mxu0 0.0
  %54 = vmatpush1.msra.mxu0 %v30
  %55 = vmatprep.subr.mxu0 0.0
  %56 = vmatpush1.msra.mxu0 %v31
  %57 = vmatprep.subr.mxu0 0.0
  %58 = vmatpush1.msra.mxu0 %v32
  %59 = vmatprep.subr.mxu0 0.0
  %60 = vmatpush1.msra.mxu0 %v33
  %61 = vmatprep.subr.mxu0 0.0
  %62 = vmatpush1.msra.mxu0 %v34
  %63 = vmatprep.subr.mxu0 0.0
  %64 = vmatpush1.msra.mxu0 %v35
  %65 = vmatprep.subr.mxu0 0.0
  %66 = vmatpush1.msra.mxu0 %v36
  %67 = vmatprep.subr.mxu0 0.0
  %68 = vmatpush1.msra.mxu0 %v37
  %69 = vmatprep.subr.mxu0 0.0
  %70 = vmatpush1.msra.mxu0 %v38
  %71 = vmatprep.subr.mxu0 0.0
  %72 = vmatpush1.msra.mxu0 %v39
  %73 = vmatprep.subr.mxu0 0.0
  %74 = vmatpush1.msra.mxu0 %v40
  %75 = vmatprep.subr.mxu0 0.0
  %76 = vmatpush1.msra.mxu0 %v41
  %77 = vmatprep.subr.mxu0 0.0
  %78 = vmatpush1.msra.mxu0 %v42
  %79 = vmatprep.subr.mxu0 0.0
  %80 = vmatpush1.msra.mxu0 %v43
  %81 = vmatprep.subr.mxu0 0.0
  %82 = vmatpush1.msra.mxu0 %v44
  %83 = vmatprep.subr.mxu0 0.0
  %84 = vmatpush1.msra.mxu0 %v45
  %85 = vmatprep.subr.mxu0 0.0
  %86 = vmatpush1.msra.mxu0 0.0
  %87 = vmatprep.subr.mxu0 0.0
  %88 = vmatpush1.msra.mxu0 0.0
  %89 = vmatprep.subr.mxu0 0.0
  %90 = vmatpush1.msra.mxu0 0.0
  %91 = vmatprep.subr.mxu0 0.0
  %92 = vmatpush1.msra.mxu0 0.0
  %93 = vmatprep.subr.mxu0 0.0
  %94 = vmatpush1.msra.mxu0 0.0
  %95 = vmatprep.subr.mxu0 0.0
  %96 = vmatpush1.msra.mxu0 0.0
  %97 = vmatprep.subr.mxu0 0.0
  %98 = vmatpush1.msra.mxu0 0.0
  %99 = vmatprep.subr.mxu0 0.0
  %100 = vmatpush1.msra.mxu0 0.0
  %101 = vmatprep.subr.mxu0 0.0
  %102 = vmatpush1.msra.mxu0 0.0
  %103 = vmatprep.subr.mxu0 0.0
  %104 = vmatpush1.msra.mxu0 0.0
  %105 = vmatprep.subr.mxu0 0.0
  %106 = vmatpush1.msra.mxu0 0.0
  %107 = vmatprep.subr.mxu0 0.0
  %108 = vmatpush1.msra.mxu0 0.0
  %109 = vmatprep.subr.mxu0 0.0
  %110 = vmatpush1.msra.mxu0 0.0
  %111 = vmatprep.subr.mxu0 0.0
  %112 = vmatpush1.msra.mxu0 0.0
  %113 = vmatprep.subr.mxu0 0.0
  %114 = vmatpush1.msra.mxu0 0.0
  %115 = vmatprep.subr.mxu0 0.0
  %116 = vmatpush1.msra.mxu0 0.0
  %117 = vmatprep.mubr.f32.mxu0 0.0
  %118 = vmatmul.mubr.f32.gmra.mrb[0].mxu0 %v14
  %v119 = vpop.f32.mrb[0].mxu0
  %v120 = vadd.f32 %v51, %v119
  %v121 = vpop.f32.mrb[0].mxu0
  %122 = vmatprep.mubr.f32.mxu0 0.0
  %123 = vmatmul.mubr.f32.gmra.mrb[0].mxu0 %v15
  %v124 = vpop.f32.mrb[0].mxu0
  %v125 = vadd.f32 %v51, %v124
  %v126 = vpop.f32.mrb[0].mxu0
  %127 = vmatprep.mubr.f32.mxu0 0.0
  %128 = vmatmul.mubr.f32.gmra.mrb[0].mxu0 %v16
  %v129 = vpop.f32.mrb[0].mxu0
  %v130 = vadd.f32 %v51, %v129
  %v131 = vpop.f32.mrb[0].mxu0
  %132 = vmatprep.mubr.f32.mxu0 0.0
  %133 = vmatmul.mubr.f32.gmra.mrb[0].mxu0 %v17
  %v134 = vpop.f32.mrb[0].mxu0
  %v135 = vadd.f32 %v51, %v134
  %v136 = vpop.f32.mrb[0].mxu0
  %137 = vmatprep.mubr.f32.mxu0 0.0
  %138 = vmatmul.mubr.f32.gmra.mrb[0].mxu0 %v18
  %v139 = vpop.f32.mrb[0].mxu0
  %v140 = vadd.f32 %v51, %v139
  %v141 = vpop.f32.mrb[0].mxu0
  %142 = vmatprep.mubr.f32.mxu0 0.0
  %143 = vmatmul.mubr.f32.gmra.mrb[0].mxu0 %v19
  %v144 = vpop.f32.mrb[0].mxu0
  %v145 = vadd.f32 %v51, %v144
  %v146 = vpop.f32.mrb[0].mxu0
  %147 = vmatprep.mubr.f32.mxu0 0.0
  %148 = vmatmul.mubr.f32.gmra.mrb[0].mxu0 %v20
  %v149 = vpop.f32.mrb[0].mxu0
  %v150 = vadd.f32 %v51, %v149
  %v151 = vpop.f32.mrb[0].mxu0
  %152 = vmatprep.mubr.f32.mxu0 0.0
  %153 = vmatmul.mubr.f32.gmra.mrb[0].mxu0 %v21
  %v154 = vpop.f32.mrb[0].mxu0
  %v155 = vadd.f32 %v51, %v154
  %v156 = vpop.f32.mrb[0].mxu0
  %157 = vmatprep.mubr.f32.mxu0 0.0
  %158 = vmatmul.mubr.f32.gmra.mrb[0].mxu0 %v22
  %v159 = vpop.f32.mrb[0].mxu0
  %v160 = vadd.f32 %v51, %v159
  %v161 = vpop.f32.mrb[0].mxu0
  %162 = vmatprep.mubr.f32.mxu0 0.0
  %163 = vmatmul.mubr.f32.gmra.mrb[0].mxu0 %v23
  %v164 = vpop.f32.mrb[0].mxu0
  %v165 = vadd.f32 %v51, %v164
  %v166 = vpop.f32.mrb[0].mxu0
  %167 = vmatprep.mubr.f32.mxu0 0.0
  %168 = vmatmul.mubr.f32.gmra.mrb[0].mxu0 %v24
  %v169 = vpop.f32.mrb[0].mxu0
  %v170 = vadd.f32 %v51, %v169
  %v171 = vpop.f32.mrb[0].mxu0
  %172 = vmatprep.mubr.f32.mxu0 0.0
  %173 = vmatmul.mubr.f32.gmra.mrb[0].mxu0 %v25
  %v174 = vpop.f32.mrb[0].mxu0
  %v175 = vadd.f32 %v51, %v174
  %v176 = vpop.f32.mrb[0].mxu0
  %177 = vmatprep.mubr.f32.mxu0 0.0
  %178 = vmatmul.mubr.f32.gmra.mrb[0].mxu0 %v26
  %v179 = vpop.f32.mrb[0].mxu0
  %v180 = vadd.f32 %v51, %v179
  %v181 = vpop.f32.mrb[0].mxu0
  %182 = vmatprep.mubr.f32.mxu0 0.0
  %183 = vmatmul.mubr.f32.gmra.mrb[0].mxu0 %v27
  %v184 = vpop.f32.mrb[0].mxu0
  %v185 = vadd.f32 %v51, %v184
  %v186 = vpop.f32.mrb[0].mxu0
  %187 = vmatprep.mubr.f32.mxu0 0.0
  %188 = vmatmul.mubr.f32.gmra.mrb[0].mxu0 %v28
  %v189 = vpop.f32.mrb[0].mxu0
  %v190 = vadd.f32 %v51, %v189
  %v191 = vpop.f32.mrb[0].mxu0
  %192 = vmatprep.mubr.f32.mxu0 0.0
  %193 = vmatmul.mubr.f32.gmra.mrb[0].mxu0 %v29
  %v194 = vpop.f32.mrb[0].mxu0
  %v195 = vadd.f32 %v51, %v194
  %v196 = vpop.f32.mrb[0].mxu0
  %197 = vdwg.mxu0
  %198 = vst [vmem:[%s3] sm:$0xff] %v120
  %199 = vst [vmem:[%s3 + $0x8] sm:$0xff] %v125
  %200 = vst [vmem:[%s3 + $0x10] sm:$0xff] %v130
  %201 = vst [vmem:[%s3 + $0x18] sm:$0xff] %v135
  %202 = vst [vmem:[%s3 + $0x20] sm:$0xff] %v140
  %203 = vst [vmem:[%s3 + $0x28] sm:$0xff] %v145
  %204 = vst [vmem:[%s3 + $0x30] sm:$0xff] %v150
  %205 = vst [vmem:[%s3 + $0x38] sm:$0xff] %v155
  %206 = vst [vmem:[%s3 + $0x40] sm:$0xff] %v160
  %207 = vst [vmem:[%s3 + $0x48] sm:$0xff] %v165
  %208 = vst [vmem:[%s3 + $0x50] sm:$0xff] %v170
  %209 = vst [vmem:[%s3 + $0x58] sm:$0xff] %v175
  %210 = vst [vmem:[%s3 + $0x60] sm:$0xff] %v180
  %211 = vst [vmem:[%s3 + $0x68] sm:$0xff] %v185
  %212 = vst [vmem:[%s3 + $0x70] sm:$0xff] %v190
  %213 = vst [vmem:[%s3 + $0x78] sm:$0xff] %v195
  // Predicated region
  $region14: #{edge_predictor.4} parent=0 // pred_check
    _
  $region15: #{edge_predictor.4} parent=0 // pred_check_branch
    %215 = sbr.rel (0) target = $region17
  $region16: #{edge_predictor.4} parent=0 // pred_region
    _
  $region17: #{edge_predictor.4} parent=0 // pred_fallthru
    _
  // Predicated region
  $region18: #{edge_predictor.4} parent=0 // pred_check
    _
  $region19: #{edge_predictor.4} parent=0 // pred_check_branch
    %217 = sbr.rel (0) target = $region21
  $region20: #{edge_predictor.4} parent=0 // pred_region
    _
  $region21: #{edge_predictor.4} parent=0 // pred_fallthru
    _

// kernel: edge_predictor.5
$region0: #{edge_predictor.5}
  #allocation0 [shape = 'u32[]', space=smem, size = 0x4, offset = 0x4, fixed_abs, tag = 'smem constant byte address 0x4 - core index']
  #allocation1 [shape = 'u32[144,128]{1,0:T(1,128)}', space=vmem, size = 0x12000, scoped, tag = 'internal scratch']
  %s0 = inlined_call_operand.vmem [shape: f32[8,128], index: 0, kind: input, shape index: {}]
  %s1 = inlined_call_operand.vmem [shape: f32[128,128], index: 1, kind: input, shape index: {}]
  %s2 = inlined_call_operand.hbm [shape: f32[8,128], index: 2, kind: output, shape index: {}]
  %s3 = sld [smem:[#allocation0]]
  $region18: #{edge_predictor.5} parent=0
    _
  %s5 = ssub.s32 1, %s3
  %s6 = scalar_select 0, %s5, %s3
  $region1: #{edge_predictor.5} parent=0
    #allocation2 [shape = 'u8[4096]{0}', space=vmem, size = 0x1000, scoped, tag = 'output window, operand 0, single buffered']
    #allocation3 [shape = 's32[1]{0}', space=sflag, size = 0x4, scoped, tag = 'scoped memory for edge_predictor.5']
    %7 = vsyncpa [#allocation3], 0
    // Predicated region
    $region2: #{edge_predictor.5} parent=1 // pred_check
      _
    $region3: #{edge_predictor.5} parent=1 // pred_check_branch
      %9 = sbr.rel (0) target = $region5
    $region4: #{edge_predictor.5} parent=1 // pred_region
      _
    $region5: #{edge_predictor.5} parent=1 // pred_fallthru
      _
    // Predicated region
    $region6: #{edge_predictor.5} parent=1 // pred_check
      _
    $region7: #{edge_predictor.5} parent=1 // pred_check_branch
      %11 = sbr.rel (0) target = $region9
    $region8: #{edge_predictor.5} parent=1 // pred_region
      _
    $region9: #{edge_predictor.5} parent=1 // pred_fallthru
      _
    %v12 = vld [vmem:[%s0] sm:$0xff]
    %v13 = vld [vmem:[%s1] sm:$0xff]
    %v14 = vld [vmem:[%s1 + $0x8] sm:$0xff]
    %v15 = vld [vmem:[%s1 + $0x10] sm:$0xff]
    %v16 = vld [vmem:[%s1 + $0x18] sm:$0xff]
    %v17 = vld [vmem:[%s1 + $0x20] sm:$0xff]
    %v18 = vld [vmem:[%s1 + $0x28] sm:$0xff]
    %v19 = vld [vmem:[%s1 + $0x30] sm:$0xff]
    %v20 = vld [vmem:[%s1 + $0x38] sm:$0xff]
    %v21 = vld [vmem:[%s1 + $0x40] sm:$0xff]
    %v22 = vld [vmem:[%s1 + $0x48] sm:$0xff]
    %v23 = vld [vmem:[%s1 + $0x50] sm:$0xff]
    %v24 = vld [vmem:[%s1 + $0x58] sm:$0xff]
    %v25 = vld [vmem:[%s1 + $0x60] sm:$0xff]
    %v26 = vld [vmem:[%s1 + $0x68] sm:$0xff]
    %v27 = vld [vmem:[%s1 + $0x70] sm:$0xff]
    %v28 = vld [vmem:[%s1 + $0x78] sm:$0xff]
    %29 = vmatprep.subr.mxu0 0.0
    %30 = vmatpush1.xpose.msra.mxu0 %v13
    %31 = vmatprep.subr.mxu0 0.0
    %32 = vmatpush1.xpose.msra.mxu0 %v14
    %33 = vmatprep.subr.mxu0 0.0
    %34 = vmatpush1.xpose.msra.mxu0 %v15
    %35 = vmatprep.subr.mxu0 0.0
    %36 = vmatpush1.xpose.msra.mxu0 %v16
    %37 = vmatprep.subr.mxu0 0.0
    %38 = vmatpush1.xpose.msra.mxu0 %v17
    %39 = vmatprep.subr.mxu0 0.0
    %40 = vmatpush1.xpose.msra.mxu0 %v18
    %41 = vmatprep.subr.mxu0 0.0
    %42 = vmatpush1.xpose.msra.mxu0 %v19
    %43 = vmatprep.subr.mxu0 0.0
    %44 = vmatpush1.xpose.msra.mxu0 %v20
    %45 = vmatprep.subr.mxu0 0.0
    %46 = vmatpush1.xpose.msra.mxu0 %v21
    %47 = vmatprep.subr.mxu0 0.0
    %48 = vmatpush1.xpose.msra.mxu0 %v22
    %49 = vmatprep.subr.mxu0 0.0
    %50 = vmatpush1.xpose.msra.mxu0 %v23
    %51 = vmatprep.subr.mxu0 0.0
    %52 = vmatpush1.xpose.msra.mxu0 %v24
    %53 = vmatprep.subr.mxu0 0.0
    %54 = vmatpush1.xpose.msra.mxu0 %v25
    %55 = vmatprep.subr.mxu0 0.0
    %56 = vmatpush1.xpose.msra.mxu0 %v26
    %57 = vmatprep.subr.mxu0 0.0
    %58 = vmatpush1.xpose.msra.mxu0 %v27
    %59 = vmatprep.subr.mxu0 0.0
    %60 = vmatpush1.xpose.msra.mxu0 %v28
    %61 = vmatprep.subr.mxu0 0.0
    %62 = vmatpush1.xpose.msra.mxu0 0.0
    %63 = vmatprep.subr.mxu0 0.0
    %64 = vmatpush1.xpose.msra.mxu0 0.0
    %65 = vmatprep.subr.mxu0 0.0
    %66 = vmatpush1.xpose.msra.mxu0 0.0
    %67 = vmatprep.subr.mxu0 0.0
    %68 = vmatpush1.xpose.msra.mxu0 0.0
    %69 = vmatprep.subr.mxu0 0.0
    %70 = vmatpush1.xpose.msra.mxu0 0.0
    %71 = vmatprep.subr.mxu0 0.0
    %72 = vmatpush1.xpose.msra.mxu0 0.0
    %73 = vmatprep.subr.mxu0 0.0
    %74 = vmatpush1.xpose.msra.mxu0 0.0
    %75 = vmatprep.subr.mxu0 0.0
    %76 = vmatpush1.xpose.msra.mxu0 0.0
    %77 = vmatprep.subr.mxu0 0.0
    %78 = vmatpush1.xpose.msra.mxu0 0.0
    %79 = vmatprep.subr.mxu0 0.0
    %80 = vmatpush1.xpose.msra.mxu0 0.0
    %81 = vmatprep.subr.mxu0 0.0
    %82 = vmatpush1.xpose.msra.mxu0 0.0
    %83 = vmatprep.subr.mxu0 0.0
    %84 = vmatpush1.xpose.msra.mxu0 0.0
    %85 = vmatprep.subr.mxu0 0.0
    %86 = vmatpush1.xpose.msra.mxu0 0.0
    %87 = vmatprep.subr.mxu0 0.0
    %88 = vmatpush1.xpose.msra.mxu0 0.0
    %89 = vmatprep.subr.mxu0 0.0
    %90 = vmatpush1.xpose.msra.mxu0 0.0
    %91 = vmatprep.subr.mxu0 0.0
    %92 = vmatpush1.xpose.msra.mxu0 0.0
    %93 = vmatprep.mubr.f32.mxu0 0.0
    %94 = vmatmul.mubr.f32.gmra.mrb[0].mxu0 %v12
    %v95 = vpop.f32.mrb[0].mxu0
    %v96 = vadd.f32 0.0, %v95
    %v97 = vpop.f32.mrb[0].mxu0
    %98 = vdwg.mxu0
    %v99 = vxor.u32 %v96, 2147483648
    %v100 = vmul.f32 %v99, 1.442695
    %v101 = vpow.pop %v100
    %v102 = vadd.f32 %v101, 1.0
    %v103 = vrcp.pop %v102
    %v104 = vmul.f32 1.0, %v103
    %105 = vst [vmem:[#allocation2] sm:$0xff] %v104
    // Predicated region
    $region10: #{edge_predictor.5} parent=1 // pred_check
      _
    $region11: #{edge_predictor.5} parent=1 // pred_check_branch
      %107 = sbr.rel (0) target = $region13
    $region12: #{edge_predictor.5} parent=1 // pred_region
      %s109 = ssub.s32 128, 128
      %110 = vsyncadd [#allocation3], %s109
      %s112 = sshll.u32 [#allocation2], 4
      %s113 = int_to_ptr.vmem [resolvable:$true] %s112
      %115 = dma.vmem_to_hbm [thread:$0]  %s113, 128, %s2, [#allocation3]
    $region13: #{edge_predictor.5} parent=1 // pred_fallthru
      _
    // Predicated region
    $region14: #{edge_predictor.5} parent=1 // pred_check
      _
    $region15: #{edge_predictor.5} parent=1 // pred_check_branch
      %117 = sbr.rel (0) target = $region17
    $region16: #{edge_predictor.5} parent=1 // pred_region
      %118 = dma.done [#allocation3], 128
    $region17: #{edge_predictor.5} parent=1 // pred_fallthru
      _
    %119 = vsyncpa [#allocation3], 1

// kernel: edge_predictor.3
$region0: #{edge_predictor.3}
  #allocation0 [shape = 'u32[]', space=smem, size = 0x4, offset = 0x4, fixed_abs, tag = 'smem constant byte address 0x4 - core index']
  #allocation1 [shape = 'u32[144,128]{1,0:T(1,128)}', space=vmem, size = 0x12000, scoped, tag = 'internal scratch']
  %s0 = inlined_call_operand.vmem [shape: f32[8,128], index: 0, kind: input, shape index: {}]
  %s1 = inlined_call_operand.vmem [shape: f32[128,128], index: 1, kind: input, shape index: {}]
  %s2 = inlined_call_operand.vmem [shape: f32[1,128], index: 2, kind: input, shape index: {}]
  %s3 = inlined_call_operand.vmem [shape: f32[8,128], index: 3, kind: output, shape index: {}]
  %s4 = sld [smem:[#allocation0]]
  $region22: #{edge_predictor.3} parent=0
    _
  %s6 = ssub.s32 1, %s4
  %s7 = scalar_select 0, %s6, %s4
  // Predicated region
  $region2: #{edge_predictor.3} parent=0 // pred_check
    _
  $region3: #{edge_predictor.3} parent=0 // pred_check_branch
    %9 = sbr.rel (0) target = $region5
  $region4: #{edge_predictor.3} parent=0 // pred_region
    _
  $region5: #{edge_predictor.3} parent=0 // pred_fallthru
    _
  // Predicated region
  $region6: #{edge_predictor.3} parent=0 // pred_check
    _
  $region7: #{edge_predictor.3} parent=0 // pred_check_branch
    %11 = sbr.rel (0) target = $region9
  $region8: #{edge_predictor.3} parent=0 // pred_region
    _
  $region9: #{edge_predictor.3} parent=0 // pred_fallthru
    _
  // Predicated region
  $region10: #{edge_predictor.3} parent=0 // pred_check
    _
  $region11: #{edge_predictor.3} parent=0 // pred_check_branch
    %13 = sbr.rel (0) target = $region13
  $region12: #{edge_predictor.3} parent=0 // pred_region
    _
  $region13: #{edge_predictor.3} parent=0 // pred_fallthru
    _
  %v14 = vld [vmem:[%s0] sm:$0xff]
  %v15 = vld [vmem:[%s1] sm:$0xff]
  %v16 = vld [vmem:[%s1 + $0x8] sm:$0xff]
  %v17 = vld [vmem:[%s1 + $0x10] sm:$0xff]
  %v18 = vld [vmem:[%s1 + $0x18] sm:$0xff]
  %v19 = vld [vmem:[%s1 + $0x20] sm:$0xff]
  %v20 = vld [vmem:[%s1 + $0x28] sm:$0xff]
  %v21 = vld [vmem:[%s1 + $0x30] sm:$0xff]
  %v22 = vld [vmem:[%s1 + $0x38] sm:$0xff]
  %v23 = vld [vmem:[%s1 + $0x40] sm:$0xff]
  %v24 = vld [vmem:[%s1 + $0x48] sm:$0xff]
  %v25 = vld [vmem:[%s1 + $0x50] sm:$0xff]
  %v26 = vld [vmem:[%s1 + $0x58] sm:$0xff]
  %v27 = vld [vmem:[%s1 + $0x60] sm:$0xff]
  %v28 = vld [vmem:[%s1 + $0x68] sm:$0xff]
  %v29 = vld [vmem:[%s1 + $0x70] sm:$0xff]
  %v30 = vld [vmem:[%s1 + $0x78] sm:$0xff]
  %v31 = vld [vmem:[%s2] sm:$0x1]
  %v33 = vlaneseq
  %v34 = vshrl.u32 %v33, 7
  %v35 = vsub.s32 0, %v34
  %v36 = vrot.slane %v31, %v35
  %38 = vmatprep.subr.mxu0 0.0
  %39 = vmatpush1.msra.mxu0 %v15
  %40 = vmatprep.subr.mxu0 0.0
  %41 = vmatpush1.msra.mxu0 %v16
  %42 = vmatprep.subr.mxu0 0.0
  %43 = vmatpush1.msra.mxu0 %v17
  %44 = vmatprep.subr.mxu0 0.0
  %45 = vmatpush1.msra.mxu0 %v18
  %46 = vmatprep.subr.mxu0 0.0
  %47 = vmatpush1.msra.mxu0 %v19
  %48 = vmatprep.subr.mxu0 0.0
  %49 = vmatpush1.msra.mxu0 %v20
  %50 = vmatprep.subr.mxu0 0.0
  %51 = vmatpush1.msra.mxu0 %v21
  %52 = vmatprep.subr.mxu0 0.0
  %53 = vmatpush1.msra.mxu0 %v22
  %54 = vmatprep.subr.mxu0 0.0
  %55 = vmatpush1.msra.mxu0 %v23
  %56 = vmatprep.subr.mxu0 0.0
  %57 = vmatpush1.msra.mxu0 %v24
  %58 = vmatprep.subr.mxu0 0.0
  %59 = vmatpush1.msra.mxu0 %v25
  %60 = vmatprep.subr.mxu0 0.0
  %61 = vmatpush1.msra.mxu0 %v26
  %62 = vmatprep.subr.mxu0 0.0
  %63 = vmatpush1.msra.mxu0 %v27
  %64 = vmatprep.subr.mxu0 0.0
  %65 = vmatpush1.msra.mxu0 %v28
  %66 = vmatprep.subr.mxu0 0.0
  %67 = vmatpush1.msra.mxu0 %v29
  %68 = vmatprep.subr.mxu0 0.0
  %69 = vmatpush1.msra.mxu0 %v30
  %70 = vmatprep.subr.mxu0 0.0
  %71 = vmatpush1.msra.mxu0 0.0
  %72 = vmatprep.subr.mxu0 0.0
  %73 = vmatpush1.msra.mxu0 0.0
  %74 = vmatprep.subr.mxu0 0.0
  %75 = vmatpush1.msra.mxu0 0.0
  %76 = vmatprep.subr.mxu0 0.0
  %77 = vmatpush1.msra.mxu0 0.0
  %78 = vmatprep.subr.mxu0 0.0
  %79 = vmatpush1.msra.mxu0 0.0
  %80 = vmatprep.subr.mxu0 0.0
  %81 = vmatpush1.msra.mxu0 0.0
  %82 = vmatprep.subr.mxu0 0.0
  %83 = vmatpush1.msra.mxu0 0.0
  %84 = vmatprep.subr.mxu0 0.0
  %85 = vmatpush1.msra.mxu0 0.0
  %86 = vmatprep.subr.mxu0 0.0
  %87 = vmatpush1.msra.mxu0 0.0
  %88 = vmatprep.subr.mxu0 0.0
  %89 = vmatpush1.msra.mxu0 0.0
  %90 = vmatprep.subr.mxu0 0.0
  %91 = vmatpush1.msra.mxu0 0.0
  %92 = vmatprep.subr.mxu0 0.0
  %93 = vmatpush1.msra.mxu0 0.0
  %94 = vmatprep.subr.mxu0 0.0
  %95 = vmatpush1.msra.mxu0 0.0
  %96 = vmatprep.subr.mxu0 0.0
  %97 = vmatpush1.msra.mxu0 0.0
  %98 = vmatprep.subr.mxu0 0.0
  %99 = vmatpush1.msra.mxu0 0.0
  %100 = vmatprep.subr.mxu0 0.0
  %101 = vmatpush1.msra.mxu0 0.0
  %102 = vmatprep.mubr.f32.mxu0 0.0
  %103 = vmatmul.mubr.f32.gmra.mrb[0].mxu0 %v14
  %v104 = vpop.f32.mrb[0].mxu0
  %v105 = vadd.f32 %v36, %v104
  %v106 = vpop.f32.mrb[0].mxu0
  %107 = vdwg.mxu0
  %108 = vst [vmem:[%s3] sm:$0xff] %v105
  // Predicated region
  $region14: #{edge_predictor.3} parent=0 // pred_check
    _
  $region15: #{edge_predictor.3} parent=0 // pred_check_branch
    %110 = sbr.rel (0) target = $region17
  $region16: #{edge_predictor.3} parent=0 // pred_region
    _
  $region17: #{edge_predictor.3} parent=0 // pred_fallthru
    _
  // Predicated region
  $region18: #{edge_predictor.3} parent=0 // pred_check
    _
  $region19: #{edge_predictor.3} parent=0 // pred_check_branch
    %112 = sbr.rel (0) target = $region21
  $region20: #{edge_predictor.3} parent=0 // pred_region
    _
  $region21: #{edge_predictor.3} parent=0 // pred_fallthru
    _

</llo_original>
